<compile_context>
chip_gen: v7x
topology: tpu7x:2x2x1
jax: 0.10.0
libtpu: 0.0.40
codegen_flags: <defaults>
</compile_context>

<pallas_src>
import jax
import jax.numpy as jnp
from jax.experimental import pallas as pl
from jax.experimental.pallas import tpu as pltpu

_LANES = 128
# Target ~2 MiB per block buffer: with double-buffered input + output that is
# ~8 MiB of VMEM — inside v5e's 16 MiB scoped-VMEM default and v7x's 64 MiB
# physical VMEM, while large enough that the ~0.35 us per-grid-step overhead
# is negligible versus the HBM transfer time (mem-bound roofline).
_TARGET_BLOCK_BYTES = 2 * 1024 * 1024


def _identity_kernel(x_ref, o_ref):
    # Whole-tile pass-through; the op is purely HBM-bandwidth bound.
    o_ref[...] = x_ref[...]


def _choose_layout(total_elems, itemsize):
    """Pick an unpadded, lane-dense 2-D view and block tiling.

    Returns (rows, cols, block_rows).  `cols` is the largest power-of-two
    multiple of 128 (capped at 8192) dividing the element count, so stores are
    unmasked, wide `vst` to a lane-dense slab.  `block_rows` is either a
    multiple of the dtype's minimum sublane count or the full row extent
    (both legal tilings) and sized to ~_TARGET_BLOCK_BYTES.
    """
    cols = _LANES
    while total_elems % (cols * 2) == 0 and cols * 2 <= 8192:
        cols *= 2
    rows = total_elems // cols

    # Sub-32-bit dtypes pack along sublanes: min tile is (8,128) f32,
    # (16,128) bf16, (32,128) int8/fp8 — make the block dtype-aware.
    min_sub = max(8, 32 // max(itemsize, 1))

    target_rows = max(min_sub, _TARGET_BLOCK_BYTES // (cols * itemsize))
    if rows <= target_rows:
        return rows, cols, rows  # single block covering the full array

    # Largest multiple of min_sub that divides rows and is <= target_rows.
    r = (target_rows // min_sub) * min_sub
    while r >= min_sub:
        if rows % r == 0:
            return rows, cols, r
        r -= min_sub
    # No clean divisor: cover the full extent with one block (always legal).
    return rows, cols, rows


class BaseModel:
    """JAX/Pallas mirror of the PyTorch BaseModel: stores config, no params."""

    def __init__(self, config):
        self.config = config

    def forward(self, batch):
        total = int(batch.size)
        itemsize = jnp.dtype(batch.dtype).itemsize

        if total == 0 or total % _LANES != 0:
            # Tail would need padding; for a pure identity the optimal choice
            # is no copy at all (zero HBM traffic), so skip the kernel.
            return batch

        rows, cols, block_rows = _choose_layout(total, itemsize)
        x2d = batch.reshape(rows, cols)  # unpadded, lane-dense 2-D view
        grid = (rows // block_rows,)

        out2d = pl.pallas_call(
            _identity_kernel,
            out_shape=jax.ShapeDtypeStruct((rows, cols), batch.dtype),
            grid=grid,
            in_specs=[pl.BlockSpec((block_rows, cols), lambda i: (i, 0))],
            out_specs=pl.BlockSpec((block_rows, cols), lambda i: (i, 0)),
            # Output aliases the input buffer: no extra HBM allocation for a
            # pass-through.
            input_output_aliases={0: 0},
            compiler_params=pltpu.CompilerParams(
                # Parallel axis shards grid steps across v7x's 2 TensorCores;
                # on single-TC v5e/v6e it is just a serial loop (harmless).
                dimension_semantics=("parallel",),
            ),
        )(x2d)

        return out2d.reshape(batch.shape)

    def __call__(self, batch):
        return self.forward(batch)


if __name__ == "__main__":
    key = jax.random.PRNGKey(0)
    # Small NCHW batch consistent with a typical vision-model input.
    x = jax.random.normal(key, (2, 4, 16, 16), dtype=jnp.float32)
    # Snapshot to host for the check (output may alias/donate the 2-D view).
    x_host = jax.device_get(x)

    model = BaseModel(config={"name": "base"})
    y = model(x)
    y = jax.block_until_ready(y)

    assert y.shape == x.shape and y.dtype == x.dtype
    assert bool(jnp.allclose(jax.device_get(y), x_host))
    print("KERNEL_OK")
</pallas_src>

<mosaic_0001>
module attributes {stable_mosaic.version = 11 : i64} {
  func.func @_identity_kernel(%arg0: i32, %arg1: memref<1x2048xf32, #tpu.memory_space<vmem>>, %arg2: memref<1x2048xf32, #tpu.memory_space<vmem>>) attributes {dimension_semantics = [#tpu.dimension_semantics<parallel>], iteration_bounds = array<i64: 1>, scalar_prefetch = 0 : i64, scratch_operands = 0 : i64, tpu.core_type = #tpu.core_type<tc>, window_params = [{transform_indices = @transform_0, window_bounds = array<i64: 1, 2048>}, {transform_indices = @transform_1, window_bounds = array<i64: 1, 2048>}]} {
    %c0 = arith.constant 0 : index
    %c0_0 = arith.constant 0 : index
    %0 = vector.load %arg1[%c0, %c0_0] : memref<1x2048xf32, #tpu.memory_space<vmem>>, vector<1x2048xf32>
    %c0_1 = arith.constant 0 : index
    %c0_2 = arith.constant 0 : index
    %1 = vector.load %arg2[%c0_1, %c0_2] : memref<1x2048xf32, #tpu.memory_space<vmem>>, vector<1x2048xf32>
    tpu.vector_store %arg2[%c0_1, %c0_2], %0 {strides = array<i32>} : memref<1x2048xf32, #tpu.memory_space<vmem>>, vector<1x2048xf32>,
    return
  }
  func.func @transform_0(%arg0: i32) -> (i32, i32) {
    %c0_i32 = arith.constant 0 : i32
    %c0_i32_0 = arith.constant 0 : i32
    return %arg0, %c0_i32 : i32, i32
  }
  func.func @transform_1(%arg0: i32) -> (i32, i32) {
    %c0_i32 = arith.constant 0 : i32
    %c0_i32_0 = arith.constant 0 : i32
    return %arg0, %c0_i32 : i32, i32
  }
}

</mosaic_0001>

<llo_original>
// kernel: tpu_custom_call.1
$region0: #{tpu_custom_call.1}
  #allocation0 [shape = 'u32[]', space=smem, size = 0x4, offset = 0x4, fixed_abs, tag = 'smem constant byte address 0x4 - core index']
  #allocation1 [shape = 'u32[144,128]{1,0:T(1,128)}', space=vmem, size = 0x12000, scoped, tag = 'internal scratch']
  %s0 = inlined_call_operand.hbm [shape: f32[1,2048], index: 0, kind: input, shape index: {}, may-alias: {0,1}]
  %s1 = inlined_call_operand.hbm [shape: f32[1,2048], index: 1, kind: output, shape index: {}, may-alias: {0,1}]
  %s2 = sld [smem:[#allocation0]]
  $region18: #{tpu_custom_call.1} parent=0
    _
  %s4 = ssub.s32 1, %s2
  %s5 = scalar_select 0, %s4, %s2
  $region1: #{tpu_custom_call.1} parent=0
    #allocation2 [shape = 'u8[8192]{0}', space=vmem, size = 0x2000, scoped, tag = 'input window, operand 0, single buffered']
    #allocation3 [shape = 's32[1]{0}', space=sflag, size = 0x4, scoped, tag = 'scoped memory for tpu_custom_call.1']
    #allocation4 [shape = 's32[1]{0}', space=sflag, size = 0x4, scoped, tag = 'scoped memory for tpu_custom_call.1']
    #allocation5 [shape = 'u8[8192]{0}', space=vmem, size = 0x2000, scoped, tag = 'output window, operand 0, single buffered']
    %6 = vsyncpa [#allocation3], 0
    %7 = vsyncpa [#allocation4], 0
    // Predicated region
    $region2: #{tpu_custom_call.1} parent=1 // pred_check
      _
    $region3: #{tpu_custom_call.1} parent=1 // pred_check_branch
      %9 = sbr.rel (0) target = $region5
    $region4: #{tpu_custom_call.1} parent=1 // pred_region
      %s11 = ssub.s32 256, 256
      %12 = vsyncadd [#allocation3], %s11
      %s14 = sshll.u32 [#allocation2], 4
      %s15 = int_to_ptr.vmem [resolvable:$true] %s14
      %17 = dma.hbm_to_vmem [thread:$0]  %s0, 256, %s15, [#allocation3]
    $region5: #{tpu_custom_call.1} parent=1 // pred_fallthru
      _
    // Predicated region
    $region6: #{tpu_custom_call.1} parent=1 // pred_check
      _
    $region7: #{tpu_custom_call.1} parent=1 // pred_check_branch
      %19 = sbr.rel (0) target = $region9
    $region8: #{tpu_custom_call.1} parent=1 // pred_region
      %20 = dma.done [#allocation3], 256
    $region9: #{tpu_custom_call.1} parent=1 // pred_fallthru
      _
    %v21 = vld [vmem:[#allocation2] sm:$0xff]
    %v22 = vld [vmem:[#allocation2 + $0x8] sm:$0xff]
    %23 = vst [vmem:[#allocation5] sm:$0xff] %v21
    %24 = vst [vmem:[#allocation5 + $0x8] sm:$0xff] %v22
    // Predicated region
    $region10: #{tpu_custom_call.1} parent=1 // pred_check
      _
    $region11: #{tpu_custom_call.1} parent=1 // pred_check_branch
      %26 = sbr.rel (0) target = $region13
    $region12: #{tpu_custom_call.1} parent=1 // pred_region
      %s28 = ssub.s32 256, 256
      %29 = vsyncadd [#allocation4], %s28
      %s31 = sshll.u32 [#allocation5], 4
      %s32 = int_to_ptr.vmem [resolvable:$true] %s31
      %34 = dma.vmem_to_hbm [thread:$0]  %s32, 256, %s1, [#allocation4]
    $region13: #{tpu_custom_call.1} parent=1 // pred_fallthru
      _
    // Predicated region
    $region14: #{tpu_custom_call.1} parent=1 // pred_check
      _
    $region15: #{tpu_custom_call.1} parent=1 // pred_check_branch
      %36 = sbr.rel (0) target = $region17
    $region16: #{tpu_custom_call.1} parent=1 // pred_region
      %37 = dma.done [#allocation4], 256
    $region17: #{tpu_custom_call.1} parent=1 // pred_fallthru
      _
    %38 = vsyncpa [#allocation3], 1
    %39 = vsyncpa [#allocation4], 1

</llo_original>
